<compile_context>
chip_gen: v7x
topology: tpu7x:2x2x1
jax: 0.10.0
libtpu: 0.0.40
codegen_flags: <defaults>
</compile_context>

<pallas_src>
import functools

import numpy as np
import jax
import jax.numpy as jnp
from jax.experimental import pallas as pl
from jax.experimental.pallas import tpu as pltpu


# ----------------------------------------------------------------------------
# Deterministic synthetic hexagonal geometry (stands in for
# magic.Geometry.lookup_table()).  Hexagon with N_RINGS rings:
# axial coords (q, r) with |q|<=n, |r|<=n, |q+r|<=n -> 3n^2+3n+1 pixels.
# ----------------------------------------------------------------------------
N_RINGS = 4


def make_lookup_table(n=N_RINGS):
    lt = {}
    idx = 0
    for q in range(-n, n + 1):
        for r in range(max(-n, -q - n), min(n, -q + n) + 1):
            lt[(q, r)] = idx
            idx += 1
    return lt


LOOKUP_TABLE = make_lookup_table()
NUM_PIXELS = len(LOOKUP_TABLE)                       # 61 for N_RINGS=4
Q_MAX = max(q for q, _ in LOOKUP_TABLE.keys())
R_MAX = max(r for _, r in LOOKUP_TABLE.keys())
Q_DIM = 2 * Q_MAX + 1
R_DIM = 2 * R_MAX + 1
QR = Q_DIM * R_DIM


def _round_up(x, m):
    return ((x + m - 1) // m) * m


QR_PAD = _round_up(QR, 128)          # lane-dense output width (128)
TB_CAP = 4096                        # max batch-row tile (fits v5e default VMEM)


def _build_tables():
    """Scatter matrix S: [NUM_PIXELS, QR_PAD] (0/1) and hole mask [1, QR_PAD]."""
    scat = np.zeros((NUM_PIXELS, QR_PAD), dtype=np.float32)
    hole = np.zeros((1, QR_PAD), dtype=np.float32)
    for q in range(Q_DIM):
        for r in range(R_DIM):
            key = (q - Q_MAX, r - R_MAX)
            col = q * R_DIM + r
            if key in LOOKUP_TABLE:
                scat[LOOKUP_TABLE[key], col] = 1.0
            else:
                hole[0, col] = 1.0
    return scat, hole


_SCAT_F32, _HOLE_MASK = _build_tables()


# ----------------------------------------------------------------------------
# Pallas kernel: exact one-hot gather via MXU matmul + VPU bias add.
# ----------------------------------------------------------------------------
def _h2p_kernel(hexa_ref, scat_ref, bias_ref, out_ref):
    acc = jnp.dot(
        hexa_ref[...],
        scat_ref[...],
        preferred_element_type=jnp.float32,
        precision=jax.lax.Precision.HIGHEST,   # exact f32 pass-through
    )
    out_ref[...] = acc + bias_ref[...]         # padding bias on hole cells


def _h2p_pallas(flat, scat, bias, tb):
    """flat: [b8, NUM_PIXELS] -> [b8, QR_PAD] f32 (tb multiple of sublane)."""
    b8 = flat.shape[0]
    grid = pl.cdiv(b8, tb)
    itemsize = jnp.dtype(flat.dtype).itemsize
    cost = pl.CostEstimate(
        flops=2 * b8 * NUM_PIXELS * QR_PAD,
        transcendentals=0,
        bytes_accessed=(b8 * NUM_PIXELS * itemsize        # input (once)
                        + NUM_PIXELS * QR_PAD * itemsize  # scatter (once)
                        + QR_PAD * 4                      # bias (once)
                        + b8 * QR_PAD * 4),               # output (once)
    )
    return pl.pallas_call(
        _h2p_kernel,
        out_shape=jax.ShapeDtypeStruct((b8, QR_PAD), jnp.float32),
        grid=(grid,),
        in_specs=[
            pl.BlockSpec((tb, NUM_PIXELS), lambda i: (i, 0)),
            pl.BlockSpec((NUM_PIXELS, QR_PAD), lambda i: (0, 0)),  # resident
            pl.BlockSpec((1, QR_PAD), lambda i: (0, 0)),           # resident
        ],
        out_specs=pl.BlockSpec((tb, QR_PAD), lambda i: (i, 0)),
        compiler_params=pltpu.CompilerParams(
            dimension_semantics=("parallel",),      # batch rows independent
            vmem_limit_bytes=32 * 1024 * 1024,
        ),
        cost_estimate=cost,
    )(flat, scat, bias)


@functools.partial(jax.jit, static_argnums=(1, 2))
def hexa_to_parallelogram(hexa, pixel_dim, padding_value=0.0):
    """JAX equivalent of HexaToParallelogram(pixel_dim, padding_value)(hexa)."""
    # Glue (matches torch semantics): swap pixel_dim with the last axis.
    hexa = jnp.swapaxes(hexa, pixel_dim, -1)
    batch_shape = hexa.shape[:-1]
    if hexa.shape[-1] > NUM_PIXELS:
        hexa = hexa[..., :NUM_PIXELS]
    num_pixels = hexa.shape[-1]
    if num_pixels != NUM_PIXELS:
        raise ValueError(
            f"expected at least {NUM_PIXELS} pixels along pixel_dim, got {num_pixels}")

    # Keep bf16 inputs as bf16 (halves input HBM bytes); everything else -> f32.
    if hexa.dtype == jnp.dtype(jnp.bfloat16):
        compute_dtype = jnp.bfloat16
        sub = 16                    # bf16 sublane packing
    else:
        compute_dtype = jnp.float32
        sub = 8

    b = int(np.prod(batch_shape)) if batch_shape else 1
    flat = hexa.reshape(b, num_pixels).astype(compute_dtype)

    # Pad rows only to the sublane multiple; partial tail block handled by grid.
    b8 = _round_up(max(b, 1), sub)
    if b8 > b:
        flat = jnp.pad(flat, ((0, b8 - b), (0, 0)))

    tb = min(TB_CAP, b8)
    # v7x megacore: once there is enough work, make sure the (parallel) grid
    # has >= 2 steps so both TensorCores are used.  Harmless on v5e/v6e.
    if tb >= b8 and b8 >= 256:
        tb = _round_up((b8 + 1) // 2, sub)

    # Scatter matrix (exact 0/1 -> exact in bf16 too) and padding bias.
    scat = jnp.asarray(_SCAT_F32, dtype=compute_dtype)
    bias = jnp.asarray(_HOLE_MASK * np.float32(padding_value), dtype=jnp.float32)

    out = _h2p_pallas(flat, scat, bias, tb)

    # Module contract: dense (batch..., Q_DIM, R_DIM) f32 output.
    out = out[:b, :QR].reshape(batch_shape + (Q_DIM, R_DIM))
    return out


# ----------------------------------------------------------------------------
# Pure-numpy reference (mirrors the PyTorch loop) for a correctness check.
# ----------------------------------------------------------------------------
def _reference(hexa, pixel_dim, padding_value=0.0):
    hexa = np.swapaxes(np.asarray(hexa, dtype=np.float32), pixel_dim, -1)
    batch_shape = hexa.shape[:-1]
    if hexa.shape[-1] > NUM_PIXELS:
        hexa = hexa[..., :NUM_PIXELS]
    out = np.full(batch_shape + (Q_DIM, R_DIM), padding_value, dtype=np.float32)
    for q in range(Q_DIM):
        for r in range(R_DIM):
            key = (q - Q_MAX, r - R_MAX)
            if key in LOOKUP_TABLE:
                out[..., q, r] = hexa[..., LOOKUP_TABLE[key]]
    return out


if __name__ == "__main__":
    key = jax.random.PRNGKey(0)

    # Case 1: (batch=2, pixels=NUM_PIXELS, channels=4), pixel_dim=1, pad=-1.
    x = jax.random.normal(key, (2, NUM_PIXELS, 4), dtype=jnp.float32)
    out = jax.block_until_ready(hexa_to_parallelogram(x, 1, -1.0))
    ref = _reference(np.asarray(x), 1, -1.0)
    assert out.shape == ref.shape, (out.shape, ref.shape)
    assert out.dtype == jnp.float32
    np.testing.assert_allclose(np.asarray(out), ref, rtol=0.0, atol=0.0)

    # Case 2: different pixel_dim / padding value.
    x2 = jax.random.normal(jax.random.PRNGKey(1), (3, 2, NUM_PIXELS),
                           dtype=jnp.float32)
    out2 = jax.block_until_ready(hexa_to_parallelogram(x2, 2, 0.5))
    ref2 = _reference(np.asarray(x2), 2, 0.5)
    np.testing.assert_allclose(np.asarray(out2), ref2, rtol=0.0, atol=0.0)

    # Case 3: bf16 input path (kept bf16 into the kernel, f32 out, exact gather).
    x3 = jax.random.normal(jax.random.PRNGKey(2), (4, NUM_PIXELS),
                           dtype=jnp.bfloat16)
    out3 = jax.block_until_ready(hexa_to_parallelogram(x3, 1, 0.0))
    ref3 = _reference(np.asarray(x3, dtype=np.float32), 1, 0.0)
    np.testing.assert_allclose(np.asarray(out3), ref3, rtol=0.0, atol=0.0)

    print("KERNEL_OK")
</pallas_src>

<mosaic_0001>
module attributes {stable_mosaic.version = 11 : i64} {
  func.func @_h2p_kernel(%arg0: i32, %arg1: memref<8x61xf32, #tpu.memory_space<vmem>>, %arg2: memref<61x128xf32, #tpu.memory_space<vmem>>, %arg3: memref<1x128xf32, #tpu.memory_space<vmem>>, %arg4: memref<8x128xf32, #tpu.memory_space<vmem>>) attributes {dimension_semantics = [#tpu.dimension_semantics<parallel>], iteration_bounds = array<i64: 1>, scalar_prefetch = 0 : i64, scratch_operands = 0 : i64, tpu.core_type = #tpu.core_type<tc>, window_params = [{transform_indices = @transform_0, window_bounds = array<i64: 8, 61>}, {pipeline_mode = #tpu.pipeline_mode<synchronous>, transform_indices = @transform_1, window_bounds = array<i64: 61, 128>}, {pipeline_mode = #tpu.pipeline_mode<synchronous>, transform_indices = @transform_2, window_bounds = array<i64: 1, 128>}, {transform_indices = @transform_3, window_bounds = array<i64: 8, 128>}]} {
    %c0 = arith.constant 0 : index
    %c0_0 = arith.constant 0 : index
    %0 = vector.load %arg1[%c0, %c0_0] : memref<8x61xf32, #tpu.memory_space<vmem>>, vector<8x61xf32>
    %c0_1 = arith.constant 0 : index
    %c0_2 = arith.constant 0 : index
    %1 = vector.load %arg2[%c0_1, %c0_2] : memref<61x128xf32, #tpu.memory_space<vmem>>, vector<61x128xf32>
    %cst = arith.constant dense<0.000000e+00> : vector<8x128xf32>
    %2 = tpu.matmul %0, %1, %cst {dimension_numbers = #tpu.dot_dimension_numbers<[1], [0], [0], [1], [0, 0, 1, 1], [], []>, precision = #tpu.contract_precision<fp32>} : vector<8x61xf32>, vector<61x128xf32>, vector<8x128xf32> -> vector<8x128xf32>
    %c0_3 = arith.constant 0 : index
    %c0_4 = arith.constant 0 : index
    %3 = vector.load %arg3[%c0_3, %c0_4] : memref<1x128xf32, #tpu.memory_space<vmem>>, vector<1x128xf32>
    %4 = vector.broadcast %3 : vector<1x128xf32> to vector<8x128xf32>
    %5 = arith.addf %2, %4 : vector<8x128xf32>
    %c0_5 = arith.constant 0 : index
    %c0_6 = arith.constant 0 : index
    %6 = vector.load %arg4[%c0_5, %c0_6] : memref<8x128xf32, #tpu.memory_space<vmem>>, vector<8x128xf32>
    tpu.vector_store %arg4[%c0_5, %c0_6], %5 {strides = array<i32>} : memref<8x128xf32, #tpu.memory_space<vmem>>, vector<8x128xf32>,
    return
  }
  func.func @transform_0(%arg0: i32) -> (i32, i32) {
    %c0_i32 = arith.constant 0 : i32
    %c0_i32_0 = arith.constant 0 : i32
    return %arg0, %c0_i32 : i32, i32
  }
  func.func @transform_1(%arg0: i32) -> (i32, i32) {
    %c0_i32 = arith.constant 0 : i32
    %c0_i32_0 = arith.constant 0 : i32
    %c0_i32_1 = arith.constant 0 : i32
    return %c0_i32, %c0_i32_0 : i32, i32
  }
  func.func @transform_2(%arg0: i32) -> (i32, i32) {
    %c0_i32 = arith.constant 0 : i32
    %c0_i32_0 = arith.constant 0 : i32
    %c0_i32_1 = arith.constant 0 : i32
    return %c0_i32, %c0_i32_0 : i32, i32
  }
  func.func @transform_3(%arg0: i32) -> (i32, i32) {
    %c0_i32 = arith.constant 0 : i32
    %c0_i32_0 = arith.constant 0 : i32
    return %arg0, %c0_i32 : i32, i32
  }
}

</mosaic_0001>

<llo_original>
// kernel: hexa_to_parallelogram.1
$region0: #{hexa_to_parallelogram.1}
  #allocation0 [shape = 'u32[]', space=smem, size = 0x4, offset = 0x4, fixed_abs, tag = 'smem constant byte address 0x4 - core index']
  #allocation1 [shape = 'u32[144,128]{1,0:T(1,128)}', space=vmem, size = 0x12000, scoped, tag = 'internal scratch']
  %s0 = inlined_call_operand.hbm [shape: f32[8,61], index: 0, kind: input, shape index: {}]
  %s1 = inlined_call_operand.hbm [shape: f32[61,128], index: 1, kind: input, shape index: {}]
  %s2 = inlined_call_operand.vmem [shape: f32[1,128], index: 2, kind: input, shape index: {}]
  %s3 = inlined_call_operand.vmem [shape: f32[8,128], index: 3, kind: output, shape index: {}]
  %s4 = sld [smem:[#allocation0]]
  $region30: #{hexa_to_parallelogram.1} parent=0
    _
  %s6 = ssub.s32 1, %s4
  %s7 = scalar_select 0, %s6, %s4
  $region1: #{hexa_to_parallelogram.1} parent=0
    #allocation2 [shape = 'u8[4096]{0}', space=vmem, size = 0x1000, scoped, tag = 'input window, operand 0, single buffered']
    #allocation3 [shape = 's32[1]{0}', space=sflag, size = 0x4, scoped, tag = 'scoped memory for hexa_to_parallelogram.1']
    #allocation4 [shape = 'u8[32768]{0}', space=vmem, size = 0x8000, scoped, tag = 'input window, operand 1, single buffered']
    #allocation5 [shape = 's32[1]{0}', space=sflag, size = 0x4, scoped, tag = 'scoped memory for hexa_to_parallelogram.1']
    %8 = vsyncpa [#allocation3], 0
    %9 = vsyncpa [#allocation5], 0
    // Predicated region
    $region2: #{hexa_to_parallelogram.1} parent=1 // pred_check
      _
    $region3: #{hexa_to_parallelogram.1} parent=1 // pred_check_branch
      %11 = sbr.rel (0) target = $region5
    $region4: #{hexa_to_parallelogram.1} parent=1 // pred_region
      %s13 = ssub.s32 128, 128
      %14 = vsyncadd [#allocation3], %s13
      %s16 = sshll.u32 [#allocation2], 4
      %s17 = int_to_ptr.vmem [resolvable:$true] %s16
      %19 = dma.hbm_to_vmem [thread:$0]  %s0, 128, %s17, [#allocation3]
    $region5: #{hexa_to_parallelogram.1} parent=1 // pred_fallthru
      _
    // Predicated region
    $region6: #{hexa_to_parallelogram.1} parent=1 // pred_check
      _
    $region7: #{hexa_to_parallelogram.1} parent=1 // pred_check_branch
      %21 = sbr.rel (0) target = $region9
    $region8: #{hexa_to_parallelogram.1} parent=1 // pred_region
      %s23 = ssub.s32 1024, 1024
      %24 = vsyncadd [#allocation5], %s23
      %s25 = sshll.u32 [#allocation4], 4
      %s26 = int_to_ptr.vmem [resolvable:$true] %s25
      %31 = dma.hbm_to_vmem [thread:$0]  %s1, 1024, %s26, [#allocation5], 128, 128, 8
    $region9: #{hexa_to_parallelogram.1} parent=1 // pred_fallthru
      _
    // Predicated region
    $region10: #{hexa_to_parallelogram.1} parent=1 // pred_check
      _
    $region11: #{hexa_to_parallelogram.1} parent=1 // pred_check_branch
      %33 = sbr.rel (0) target = $region13
    $region12: #{hexa_to_parallelogram.1} parent=1 // pred_region
      _
    $region13: #{hexa_to_parallelogram.1} parent=1 // pred_fallthru
      _
    // Predicated region
    $region14: #{hexa_to_parallelogram.1} parent=1 // pred_check
      _
    $region15: #{hexa_to_parallelogram.1} parent=1 // pred_check_branch
      %35 = sbr.rel (0) target = $region17
    $region16: #{hexa_to_parallelogram.1} parent=1 // pred_region
      %36 = dma.done [#allocation3], 128
    $region17: #{hexa_to_parallelogram.1} parent=1 // pred_fallthru
      _
    // Predicated region
    $region18: #{hexa_to_parallelogram.1} parent=1 // pred_check
      _
    $region19: #{hexa_to_parallelogram.1} parent=1 // pred_check_branch
      %38 = sbr.rel (0) target = $region21
    $region20: #{hexa_to_parallelogram.1} parent=1 // pred_region
      %39 = dma.done [#allocation5], 1024
    $region21: #{hexa_to_parallelogram.1} parent=1 // pred_fallthru
      _
    %v40 = vld [vmem:[#allocation2] sm:$0xff]
    %v41 = vld [vmem:[#allocation4] sm:$0xff]
    %v42 = vld [vmem:[#allocation4 + $0x8] sm:$0xff]
    %v43 = vld [vmem:[#allocation4 + $0x10] sm:$0xff]
    %v44 = vld [vmem:[#allocation4 + $0x18] sm:$0xff]
    %v45 = vld [vmem:[#allocation4 + $0x20] sm:$0xff]
    %v46 = vld [vmem:[#allocation4 + $0x28] sm:$0xff]
    %v47 = vld [vmem:[#allocation4 + $0x30] sm:$0xff]
    %v48 = vld [vmem:[#allocation4 + $0x38] sm:$0x1f]
    %v49 = vld [vmem:[%s2] sm:$0x1]
    %v51 = vlaneseq
    %v52 = vshrl.u32 %v51, 7
    %v53 = vsub.s32 0, %v52
    %v54 = vrot.slane %v49, %v53
    %vm56 = vcmask 498688
    %v58 = vsel %vm56, %v40, 0
    %vm60 = vcmask 1044480
    %v62 = vsel %vm60, %v48, 0
    %64 = vmatprep.subr.mxu0 0.0
    %v65 = vand.u32 %v41, 4294901760
    %66 = vmatpush1.msra.mxu0 %v65
    %67 = vmatprep.subr.mxu0 0.0
    %v68 = vand.u32 %v42, 4294901760
    %69 = vmatpush1.msra.mxu0 %v68
    %70 = vmatprep.subr.mxu0 0.0
    %v71 = vand.u32 %v43, 4294901760
    %72 = vmatpush1.msra.mxu0 %v71
    %73 = vmatprep.subr.mxu0 0.0
    %v74 = vand.u32 %v44, 4294901760
    %75 = vmatpush1.msra.mxu0 %v74
    %76 = vmatprep.subr.mxu0 0.0
    %v77 = vand.u32 %v45, 4294901760
    %78 = vmatpush1.msra.mxu0 %v77
    %79 = vmatprep.subr.mxu0 0.0
    %v80 = vand.u32 %v46, 4294901760
    %81 = vmatpush1.msra.mxu0 %v80
    %82 = vmatprep.subr.mxu0 0.0
    %v83 = vand.u32 %v47, 4294901760
    %84 = vmatpush1.msra.mxu0 %v83
    %85 = vmatprep.subr.mxu0 0.0
    %v86 = vand.u32 %v62, 4294901760
    %87 = vmatpush1.msra.mxu0 %v86
    %88 = vmatprep.subr.mxu0 0.0
    %89 = vmatpush1.msra.mxu0 0.0
    %90 = vmatprep.subr.mxu0 0.0
    %91 = vmatpush1.msra.mxu0 0.0
    %92 = vmatprep.subr.mxu0 0.0
    %93 = vmatpush1.msra.mxu0 0.0
    %94 = vmatprep.subr.mxu0 0.0
    %95 = vmatpush1.msra.mxu0 0.0
    %96 = vmatprep.subr.mxu0 0.0
    %97 = vmatpush1.msra.mxu0 0.0
    %98 = vmatprep.subr.mxu0 0.0
    %99 = vmatpush1.msra.mxu0 0.0
    %100 = vmatprep.subr.mxu0 0.0
    %101 = vmatpush1.msra.mxu0 0.0
    %102 = vmatprep.subr.mxu0 0.0
    %103 = vmatpush1.msra.mxu0 0.0
    %104 = vmatprep.subr.mxu0 0.0
    %105 = vmatpush1.msra.mxu0 0.0
    %106 = vmatprep.subr.mxu0 0.0
    %107 = vmatpush1.msra.mxu0 0.0
    %108 = vmatprep.subr.mxu0 0.0
    %109 = vmatpush1.msra.mxu0 0.0
    %110 = vmatprep.subr.mxu0 0.0
    %111 = vmatpush1.msra.mxu0 0.0
    %112 = vmatprep.subr.mxu0 0.0
    %113 = vmatpush1.msra.mxu0 0.0
    %114 = vmatprep.subr.mxu0 0.0
    %115 = vmatpush1.msra.mxu0 0.0
    %116 = vmatprep.subr.mxu0 0.0
    %117 = vmatpush1.msra.mxu0 0.0
    %118 = vmatprep.subr.mxu0 0.0
    %119 = vmatpush1.msra.mxu0 0.0
    %120 = vmatprep.subr.mxu0 0.0
    %121 = vmatpush1.msra.mxu0 0.0
    %122 = vmatprep.subr.mxu0 0.0
    %123 = vmatpush1.msra.mxu0 0.0
    %124 = vmatprep.subr.mxu0 0.0
    %125 = vmatpush1.msra.mxu0 0.0
    %126 = vmatprep.subr.mxu0 0.0
    %127 = vmatpush1.msra.mxu0 0.0
    %128 = vmatprep.subr.mxu0 0.0
    %129 = vmatpush1.msra.mxu0 0.0
    %130 = vmatprep.subr.mxu0 0.0
    %131 = vmatpush1.msra.mxu0 0.0
    %132 = vmatprep.subr.mxu0 0.0
    %133 = vmatpush1.msra.mxu0 0.0
    %134 = vmatprep.subr.mxu0 0.0
    %135 = vmatpush1.msra.mxu0 0.0
    %136 = vmatprep.mubr.f32.mxu0 0.0
    %v137 = vand.u32 %v58, 4294901760
    %v138 = vsub.f32 %v58, %v137
    %v139 = vand.u32 %v138, 4294901760
    %v140 = vsub.f32 %v138, %v139
    %v141 = vand.u32 %v140, 4294901760
    %142 = vmatmul.mubr.f32.gmra.mrb[0].mxu0 %v141
    %v143 = vpop.f32.mrb[0].mxu0
    %v144 = vadd.f32 %v54, %v143
    %v145 = vpop.f32.mrb[0].mxu0
    %146 = vdwg.mxu0
    %147 = vmatprep.subr.mxu0 0.0
    %v148 = vand.u32 %v41, 4294901760
    %v149 = vsub.f32 %v41, %v148
    %v150 = vand.u32 %v149, 4294901760
    %v151 = vsub.f32 %v149, %v150
    %v152 = vand.u32 %v151, 4294901760
    %153 = vmatpush1.msra.mxu0 %v152
    %154 = vmatprep.subr.mxu0 0.0
    %v155 = vand.u32 %v42, 4294901760
    %v156 = vsub.f32 %v42, %v155
    %v157 = vand.u32 %v156, 4294901760
    %v158 = vsub.f32 %v156, %v157
    %v159 = vand.u32 %v158, 4294901760
    %160 = vmatpush1.msra.mxu0 %v159
    %161 = vmatprep.subr.mxu0 0.0
    %v162 = vand.u32 %v43, 4294901760
    %v163 = vsub.f32 %v43, %v162
    %v164 = vand.u32 %v163, 4294901760
    %v165 = vsub.f32 %v163, %v164
    %v166 = vand.u32 %v165, 4294901760
    %167 = vmatpush1.msra.mxu0 %v166
    %168 = vmatprep.subr.mxu0 0.0
    %v169 = vand.u32 %v44, 4294901760
    %v170 = vsub.f32 %v44, %v169
    %v171 = vand.u32 %v170, 4294901760
    %v172 = vsub.f32 %v170, %v171
    %v173 = vand.u32 %v172, 4294901760
    %174 = vmatpush1.msra.mxu0 %v173
    %175 = vmatprep.subr.mxu0 0.0
    %v176 = vand.u32 %v45, 4294901760
    %v177 = vsub.f32 %v45, %v176
    %v178 = vand.u32 %v177, 4294901760
    %v179 = vsub.f32 %v177, %v178
    %v180 = vand.u32 %v179, 4294901760
    %181 = vmatpush1.msra.mxu0 %v180
    %182 = vmatprep.subr.mxu0 0.0
    %v183 = vand.u32 %v46, 4294901760
    %v184 = vsub.f32 %v46, %v183
    %v185 = vand.u32 %v184, 4294901760
    %v186 = vsub.f32 %v184, %v185
    %v187 = vand.u32 %v186, 4294901760
    %188 = vmatpush1.msra.mxu0 %v187
    %189 = vmatprep.subr.mxu0 0.0
    %v190 = vand.u32 %v47, 4294901760
    %v191 = vsub.f32 %v47, %v190
    %v192 = vand.u32 %v191, 4294901760
    %v193 = vsub.f32 %v191, %v192
    %v194 = vand.u32 %v193, 4294901760
    %195 = vmatpush1.msra.mxu0 %v194
    %196 = vmatprep.subr.mxu0 0.0
    %v197 = vand.u32 %v62, 4294901760
    %v198 = vsub.f32 %v62, %v197
    %v199 = vand.u32 %v198, 4294901760
    %v200 = vsub.f32 %v198, %v199
    %v201 = vand.u32 %v200, 4294901760
    %202 = vmatpush1.msra.mxu0 %v201
    %203 = vmatprep.subr.mxu0 0.0
    %204 = vmatpush1.msra.mxu0 0.0
    %205 = vmatprep.subr.mxu0 0.0
    %206 = vmatpush1.msra.mxu0 0.0
    %207 = vmatprep.subr.mxu0 0.0
    %208 = vmatpush1.msra.mxu0 0.0
    %209 = vmatprep.subr.mxu0 0.0
    %210 = vmatpush1.msra.mxu0 0.0
    %211 = vmatprep.subr.mxu0 0.0
    %212 = vmatpush1.msra.mxu0 0.0
    %213 = vmatprep.subr.mxu0 0.0
    %214 = vmatpush1.msra.mxu0 0.0
    %215 = vmatprep.subr.mxu0 0.0
    %216 = vmatpush1.msra.mxu0 0.0
    %217 = vmatprep.subr.mxu0 0.0
    %218 = vmatpush1.msra.mxu0 0.0
    %219 = vmatprep.subr.mxu0 0.0
    %220 = vmatpush1.msra.mxu0 0.0
    %221 = vmatprep.subr.mxu0 0.0
    %222 = vmatpush1.msra.mxu0 0.0
    %223 = vmatprep.subr.mxu0 0.0
    %224 = vmatpush1.msra.mxu0 0.0
    %225 = vmatprep.subr.mxu0 0.0
    %226 = vmatpush1.msra.mxu0 0.0
    %227 = vmatprep.subr.mxu0 0.0
    %228 = vmatpush1.msra.mxu0 0.0
    %229 = vmatprep.subr.mxu0 0.0
    %230 = vmatpush1.msra.mxu0 0.0
    %231 = vmatprep.subr.mxu0 0.0
    %232 = vmatpush1.msra.mxu0 0.0
    %233 = vmatprep.subr.mxu0 0.0
    %234 = vmatpush1.msra.mxu0 0.0
    %235 = vmatprep.subr.mxu0 0.0
    %236 = vmatpush1.msra.mxu0 0.0
    %237 = vmatprep.subr.mxu0 0.0
    %238 = vmatpush1.msra.mxu0 0.0
    %239 = vmatprep.subr.mxu0 0.0
    %240 = vmatpush1.msra.mxu0 0.0
    %241 = vmatprep.subr.mxu0 0.0
    %242 = vmatpush1.msra.mxu0 0.0
    %243 = vmatprep.subr.mxu0 0.0
    %244 = vmatpush1.msra.mxu0 0.0
    %245 = vmatprep.subr.mxu0 0.0
    %246 = vmatpush1.msra.mxu0 0.0
    %247 = vmatprep.subr.mxu0 0.0
    %248 = vmatpush1.msra.mxu0 0.0
    %249 = vmatprep.subr.mxu0 0.0
    %250 = vmatpush1.msra.mxu0 0.0
    %251 = vmatprep.mubr.f32.mxu0 0.0
    %v252 = vand.u32 %v58, 4294901760
    %253 = vmatmul.mubr.f32.gmra.mrb[0].mxu0 %v252
    %v254 = vpop.f32.mrb[0].mxu0
    %v255 = vadd.f32 %v144, %v254
    %v256 = vpop.f32.mrb[0].mxu0
    %257 = vdwg.mxu0
    %258 = vmatprep.subr.mxu0 0.0
    %v259 = vand.u32 %v41, 4294901760
    %v260 = vsub.f32 %v41, %v259
    %261 = vmatpush1.msra.mxu0 %v260
    %262 = vmatprep.subr.mxu0 0.0
    %v263 = vand.u32 %v42, 4294901760
    %v264 = vsub.f32 %v42, %v263
    %265 = vmatpush1.msra.mxu0 %v264
    %266 = vmatprep.subr.mxu0 0.0
    %v267 = vand.u32 %v43, 4294901760
    %v268 = vsub.f32 %v43, %v267
    %269 = vmatpush1.msra.mxu0 %v268
    %270 = vmatprep.subr.mxu0 0.0
    %v271 = vand.u32 %v44, 4294901760
    %v272 = vsub.f32 %v44, %v271
    %273 = vmatpush1.msra.mxu0 %v272
    %274 = vmatprep.subr.mxu0 0.0
    %v275 = vand.u32 %v45, 4294901760
    %v276 = vsub.f32 %v45, %v275
    %277 = vmatpush1.msra.mxu0 %v276
    %278 = vmatprep.subr.mxu0 0.0
    %v279 = vand.u32 %v46, 4294901760
    %v280 = vsub.f32 %v46, %v279
    %281 = vmatpush1.msra.mxu0 %v280
    %282 = vmatprep.subr.mxu0 0.0
    %v283 = vand.u32 %v47, 4294901760
    %v284 = vsub.f32 %v47, %v283
    %285 = vmatpush1.msra.mxu0 %v284
    %286 = vmatprep.subr.mxu0 0.0
    %v287 = vand.u32 %v62, 4294901760
    %v288 = vsub.f32 %v62, %v287
    %289 = vmatpush1.msra.mxu0 %v288
    %290 = vmatprep.subr.mxu0 0.0
    %291 = vmatpush1.msra.mxu0 0.0
    %292 = vmatprep.subr.mxu0 0.0
    %293 = vmatpush1.msra.mxu0 0.0
    %294 = vmatprep.subr.mxu0 0.0
    %295 = vmatpush1.msra.mxu0 0.0
    %296 = vmatprep.subr.mxu0 0.0
    %297 = vmatpush1.msra.mxu0 0.0
    %298 = vmatprep.subr.mxu0 0.0
    %299 = vmatpush1.msra.mxu0 0.0
    %300 = vmatprep.subr.mxu0 0.0
    %301 = vmatpush1.msra.mxu0 0.0
    %302 = vmatprep.subr.mxu0 0.0
    %303 = vmatpush1.msra.mxu0 0.0
    %304 = vmatprep.subr.mxu0 0.0
    %305 = vmatpush1.msra.mxu0 0.0
    %306 = vmatprep.subr.mxu0 0.0
    %307 = vmatpush1.msra.mxu0 0.0
    %308 = vmatprep.subr.mxu0 0.0
    %309 = vmatpush1.msra.mxu0 0.0
    %310 = vmatprep.subr.mxu0 0.0
    %311 = vmatpush1.msra.mxu0 0.0
    %312 = vmatprep.subr.mxu0 0.0
    %313 = vmatpush1.msra.mxu0 0.0
    %314 = vmatprep.subr.mxu0 0.0
    %315 = vmatpush1.msra.mxu0 0.0
    %316 = vmatprep.subr.mxu0 0.0
    %317 = vmatpush1.msra.mxu0 0.0
    %318 = vmatprep.subr.mxu0 0.0
    %319 = vmatpush1.msra.mxu0 0.0
    %320 = vmatprep.subr.mxu0 0.0
    %321 = vmatpush1.msra.mxu0 0.0
    %322 = vmatprep.subr.mxu0 0.0
    %323 = vmatpush1.msra.mxu0 0.0
    %324 = vmatprep.subr.mxu0 0.0
    %325 = vmatpush1.msra.mxu0 0.0
    %326 = vmatprep.subr.mxu0 0.0
    %327 = vmatpush1.msra.mxu0 0.0
    %328 = vmatprep.subr.mxu0 0.0
    %329 = vmatpush1.msra.mxu0 0.0
    %330 = vmatprep.subr.mxu0 0.0
    %331 = vmatpush1.msra.mxu0 0.0
    %332 = vmatprep.subr.mxu0 0.0
    %333 = vmatpush1.msra.mxu0 0.0
    %334 = vmatprep.subr.mxu0 0.0
    %335 = vmatpush1.msra.mxu0 0.0
    %336 = vmatprep.subr.mxu0 0.0
    %337 = vmatpush1.msra.mxu0 0.0
    %338 = vmatprep.mubr.f32.mxu0 0.0
    %v339 = vand.u32 %v58, 4294901760
    %v340 = vsub.f32 %v58, %v339
    %341 = vmatmul.mubr.f32.gmra.mrb[0].mxu0 %v340
    %v342 = vpop.f32.mrb[0].mxu0
    %v343 = vadd.f32 %v255, %v342
    %v344 = vpop.f32.mrb[0].mxu0
    %345 = vdwg.mxu0
    %346 = vmatprep.subr.mxu0 0.0
    %v347 = vand.u32 %v41, 4294901760
    %348 = vmatpush1.msra.mxu0 %v347
    %349 = vmatprep.subr.mxu0 0.0
    %v350 = vand.u32 %v42, 4294901760
    %351 = vmatpush1.msra.mxu0 %v350
    %352 = vmatprep.subr.mxu0 0.0
    %v353 = vand.u32 %v43, 4294901760
    %354 = vmatpush1.msra.mxu0 %v353
    %355 = vmatprep.subr.mxu0 0.0
    %v356 = vand.u32 %v44, 4294901760
    %357 = vmatpush1.msra.mxu0 %v356
    %358 = vmatprep.subr.mxu0 0.0
    %v359 = vand.u32 %v45, 4294901760
    %360 = vmatpush1.msra.mxu0 %v359
    %361 = vmatprep.subr.mxu0 0.0
    %v362 = vand.u32 %v46, 4294901760
    %363 = vmatpush1.msra.mxu0 %v362
    %364 = vmatprep.subr.mxu0 0.0
    %v365 = vand.u32 %v47, 4294901760
    %366 = vmatpush1.msra.mxu0 %v365
    %367 = vmatprep.subr.mxu0 0.0
    %v368 = vand.u32 %v62, 4294901760
    %369 = vmatpush1.msra.mxu0 %v368
    %370 = vmatprep.subr.mxu0 0.0
    %371 = vmatpush1.msra.mxu0 0.0
    %372 = vmatprep.subr.mxu0 0.0
    %373 = vmatpush1.msra.mxu0 0.0
    %374 = vmatprep.subr.mxu0 0.0
    %375 = vmatpush1.msra.mxu0 0.0
    %376 = vmatprep.subr.mxu0 0.0
    %377 = vmatpush1.msra.mxu0 0.0
    %378 = vmatprep.subr.mxu0 0.0
    %379 = vmatpush1.msra.mxu0 0.0
    %380 = vmatprep.subr.mxu0 0.0
    %381 = vmatpush1.msra.mxu0 0.0
    %382 = vmatprep.subr.mxu0 0.0
    %383 = vmatpush1.msra.mxu0 0.0
    %384 = vmatprep.subr.mxu0 0.0
    %385 = vmatpush1.msra.mxu0 0.0
    %386 = vmatprep.subr.mxu0 0.0
    %387 = vmatpush1.msra.mxu0 0.0
    %388 = vmatprep.subr.mxu0 0.0
    %389 = vmatpush1.msra.mxu0 0.0
    %390 = vmatprep.subr.mxu0 0.0
    %391 = vmatpush1.msra.mxu0 0.0
    %392 = vmatprep.subr.mxu0 0.0
    %393 = vmatpush1.msra.mxu0 0.0
    %394 = vmatprep.subr.mxu0 0.0
    %395 = vmatpush1.msra.mxu0 0.0
    %396 = vmatprep.subr.mxu0 0.0
    %397 = vmatpush1.msra.mxu0 0.0
    %398 = vmatprep.subr.mxu0 0.0
    %399 = vmatpush1.msra.mxu0 0.0
    %400 = vmatprep.subr.mxu0 0.0
    %401 = vmatpush1.msra.mxu0 0.0
    %402 = vmatprep.subr.mxu0 0.0
    %403 = vmatpush1.msra.mxu0 0.0
    %404 = vmatprep.subr.mxu0 0.0
    %405 = vmatpush1.msra.mxu0 0.0
    %406 = vmatprep.subr.mxu0 0.0
    %407 = vmatpush1.msra.mxu0 0.0
    %408 = vmatprep.subr.mxu0 0.0
    %409 = vmatpush1.msra.mxu0 0.0
    %410 = vmatprep.subr.mxu0 0.0
    %411 = vmatpush1.msra.mxu0 0.0
    %412 = vmatprep.subr.mxu0 0.0
    %413 = vmatpush1.msra.mxu0 0.0
    %414 = vmatprep.subr.mxu0 0.0
    %415 = vmatpush1.msra.mxu0 0.0
    %416 = vmatprep.subr.mxu0 0.0
    %417 = vmatpush1.msra.mxu0 0.0
    %418 = vmatprep.mubr.f32.mxu0 0.0
    %v419 = vand.u32 %v58, 4294901760
    %v420 = vsub.f32 %v58, %v419
    %v421 = vand.u32 %v420, 4294901760
    %422 = vmatmul.mubr.f32.gmra.mrb[0].mxu0 %v421
    %v423 = vpop.f32.mrb[0].mxu0
    %v424 = vadd.f32 %v343, %v423
    %v425 = vpop.f32.mrb[0].mxu0
    %426 = vdwg.mxu0
    %427 = vmatprep.subr.mxu0 0.0
    %v428 = vand.u32 %v41, 4294901760
    %v429 = vsub.f32 %v41, %v428
    %v430 = vand.u32 %v429, 4294901760
    %431 = vmatpush1.msra.mxu0 %v430
    %432 = vmatprep.subr.mxu0 0.0
    %v433 = vand.u32 %v42, 4294901760
    %v434 = vsub.f32 %v42, %v433
    %v435 = vand.u32 %v434, 4294901760
    %436 = vmatpush1.msra.mxu0 %v435
    %437 = vmatprep.subr.mxu0 0.0
    %v438 = vand.u32 %v43, 4294901760
    %v439 = vsub.f32 %v43, %v438
    %v440 = vand.u32 %v439, 4294901760
    %441 = vmatpush1.msra.mxu0 %v440
    %442 = vmatprep.subr.mxu0 0.0
    %v443 = vand.u32 %v44, 4294901760
    %v444 = vsub.f32 %v44, %v443
    %v445 = vand.u32 %v444, 4294901760
    %446 = vmatpush1.msra.mxu0 %v445
    %447 = vmatprep.subr.mxu0 0.0
    %v448 = vand.u32 %v45, 4294901760
    %v449 = vsub.f32 %v45, %v448
    %v450 = vand.u32 %v449, 4294901760
    %451 = vmatpush1.msra.mxu0 %v450
    %452 = vmatprep.subr.mxu0 0.0
    %v453 = vand.u32 %v46, 4294901760
    %v454 = vsub.f32 %v46, %v453
    %v455 = vand.u32 %v454, 4294901760
    %456 = vmatpush1.msra.mxu0 %v455
    %457 = vmatprep.subr.mxu0 0.0
    %v458 = vand.u32 %v47, 4294901760
    %v459 = vsub.f32 %v47, %v458
    %v460 = vand.u32 %v459, 4294901760
    %461 = vmatpush1.msra.mxu0 %v460
    %462 = vmatprep.subr.mxu0 0.0
    %v463 = vand.u32 %v62, 4294901760
    %v464 = vsub.f32 %v62, %v463
    %v465 = vand.u32 %v464, 4294901760
    %466 = vmatpush1.msra.mxu0 %v465
    %467 = vmatprep.subr.mxu0 0.0
    %468 = vmatpush1.msra.mxu0 0.0
    %469 = vmatprep.subr.mxu0 0.0
    %470 = vmatpush1.msra.mxu0 0.0
    %471 = vmatprep.subr.mxu0 0.0
    %472 = vmatpush1.msra.mxu0 0.0
    %473 = vmatprep.subr.mxu0 0.0
    %474 = vmatpush1.msra.mxu0 0.0
    %475 = vmatprep.subr.mxu0 0.0
    %476 = vmatpush1.msra.mxu0 0.0
    %477 = vmatprep.subr.mxu0 0.0
    %478 = vmatpush1.msra.mxu0 0.0
    %479 = vmatprep.subr.mxu0 0.0
    %480 = vmatpush1.msra.mxu0 0.0
    %481 = vmatprep.subr.mxu0 0.0
    %482 = vmatpush1.msra.mxu0 0.0
    %483 = vmatprep.subr.mxu0 0.0
    %484 = vmatpush1.msra.mxu0 0.0
    %485 = vmatprep.subr.mxu0 0.0
    %486 = vmatpush1.msra.mxu0 0.0
    %487 = vmatprep.subr.mxu0 0.0
    %488 = vmatpush1.msra.mxu0 0.0
    %489 = vmatprep.subr.mxu0 0.0
    %490 = vmatpush1.msra.mxu0 0.0
    %491 = vmatprep.subr.mxu0 0.0
    %492 = vmatpush1.msra.mxu0 0.0
    %493 = vmatprep.subr.mxu0 0.0
    %494 = vmatpush1.msra.mxu0 0.0
    %495 = vmatprep.subr.mxu0 0.0
    %496 = vmatpush1.msra.mxu0 0.0
    %497 = vmatprep.subr.mxu0 0.0
    %498 = vmatpush1.msra.mxu0 0.0
    %499 = vmatprep.subr.mxu0 0.0
    %500 = vmatpush1.msra.mxu0 0.0
    %501 = vmatprep.subr.mxu0 0.0
    %502 = vmatpush1.msra.mxu0 0.0
    %503 = vmatprep.subr.mxu0 0.0
    %504 = vmatpush1.msra.mxu0 0.0
    %505 = vmatprep.subr.mxu0 0.0
    %506 = vmatpush1.msra.mxu0 0.0
    %507 = vmatprep.subr.mxu0 0.0
    %508 = vmatpush1.msra.mxu0 0.0
    %509 = vmatprep.subr.mxu0 0.0
    %510 = vmatpush1.msra.mxu0 0.0
    %511 = vmatprep.subr.mxu0 0.0
    %512 = vmatpush1.msra.mxu0 0.0
    %513 = vmatprep.subr.mxu0 0.0
    %514 = vmatpush1.msra.mxu0 0.0
    %515 = vmatprep.mubr.f32.mxu0 0.0
    %v516 = vand.u32 %v58, 4294901760
    %517 = vmatmul.mubr.f32.gmra.mrb[0].mxu0 %v516
    %v518 = vpop.f32.mrb[0].mxu0
    %v519 = vadd.f32 %v424, %v518
    %v520 = vpop.f32.mrb[0].mxu0
    %521 = vdwg.mxu0
    %522 = vmatprep.subr.mxu0 0.0
    %v523 = vand.u32 %v41, 4294901760
    %524 = vmatpush1.msra.mxu0 %v523
    %525 = vmatprep.subr.mxu0 0.0
    %v526 = vand.u32 %v42, 4294901760
    %527 = vmatpush1.msra.mxu0 %v526
    %528 = vmatprep.subr.mxu0 0.0
    %v529 = vand.u32 %v43, 4294901760
    %530 = vmatpush1.msra.mxu0 %v529
    %531 = vmatprep.subr.mxu0 0.0
    %v532 = vand.u32 %v44, 4294901760
    %533 = vmatpush1.msra.mxu0 %v532
    %534 = vmatprep.subr.mxu0 0.0
    %v535 = vand.u32 %v45, 4294901760
    %536 = vmatpush1.msra.mxu0 %v535
    %537 = vmatprep.subr.mxu0 0.0
    %v538 = vand.u32 %v46, 4294901760
    %539 = vmatpush1.msra.mxu0 %v538
    %540 = vmatprep.subr.mxu0 0.0
    %v541 = vand.u32 %v47, 4294901760
    %542 = vmatpush1.msra.mxu0 %v541
    %543 = vmatprep.subr.mxu0 0.0
    %v544 = vand.u32 %v62, 4294901760
    %545 = vmatpush1.msra.mxu0 %v544
    %546 = vmatprep.subr.mxu0 0.0
    %547 = vmatpush1.msra.mxu0 0.0
    %548 = vmatprep.subr.mxu0 0.0
    %549 = vmatpush1.msra.mxu0 0.0
    %550 = vmatprep.subr.mxu0 0.0
    %551 = vmatpush1.msra.mxu0 0.0
    %552 = vmatprep.subr.mxu0 0.0
    %553 = vmatpush1.msra.mxu0 0.0
    %554 = vmatprep.subr.mxu0 0.0
    %555 = vmatpush1.msra.mxu0 0.0
    %556 = vmatprep.subr.mxu0 0.0
    %557 = vmatpush1.msra.mxu0 0.0
    %558 = vmatprep.subr.mxu0 0.0
    %559 = vmatpush1.msra.mxu0 0.0
    %560 = vmatprep.subr.mxu0 0.0
    %561 = vmatpush1.msra.mxu0 0.0
    %562 = vmatprep.subr.mxu0 0.0
    %563 = vmatpush1.msra.mxu0 0.0
    %564 = vmatprep.subr.mxu0 0.0
    %565 = vmatpush1.msra.mxu0 0.0
    %566 = vmatprep.subr.mxu0 0.0
    %567 = vmatpush1.msra.mxu0 0.0
    %568 = vmatprep.subr.mxu0 0.0
    %569 = vmatpush1.msra.mxu0 0.0
    %570 = vmatprep.subr.mxu0 0.0
    %571 = vmatpush1.msra.mxu0 0.0
    %572 = vmatprep.subr.mxu0 0.0
    %573 = vmatpush1.msra.mxu0 0.0
    %574 = vmatprep.subr.mxu0 0.0
    %575 = vmatpush1.msra.mxu0 0.0
    %576 = vmatprep.subr.mxu0 0.0
    %577 = vmatpush1.msra.mxu0 0.0
    %578 = vmatprep.subr.mxu0 0.0
    %579 = vmatpush1.msra.mxu0 0.0
    %580 = vmatprep.subr.mxu0 0.0
    %581 = vmatpush1.msra.mxu0 0.0
    %582 = vmatprep.subr.mxu0 0.0
    %583 = vmatpush1.msra.mxu0 0.0
    %584 = vmatprep.subr.mxu0 0.0
    %585 = vmatpush1.msra.mxu0 0.0
    %586 = vmatprep.subr.mxu0 0.0
    %587 = vmatpush1.msra.mxu0 0.0
    %588 = vmatprep.subr.mxu0 0.0
    %589 = vmatpush1.msra.mxu0 0.0
    %590 = vmatprep.subr.mxu0 0.0
    %591 = vmatpush1.msra.mxu0 0.0
    %592 = vmatprep.subr.mxu0 0.0
    %593 = vmatpush1.msra.mxu0 0.0
    %594 = vmatprep.mubr.f32.mxu0 0.0
    %v595 = vand.u32 %v58, 4294901760
    %596 = vmatmul.mubr.f32.gmra.mrb[0].mxu0 %v595
    %v597 = vpop.f32.mrb[0].mxu0
    %v598 = vadd.f32 %v519, %v597
    %v599 = vpop.f32.mrb[0].mxu0
    %600 = vdwg.mxu0
    %601 = vst [vmem:[%s3] sm:$0xff] %v598
    // Predicated region
    $region22: #{hexa_to_parallelogram.1} parent=1 // pred_check
      _
    $region23: #{hexa_to_parallelogram.1} parent=1 // pred_check_branch
      %603 = sbr.rel (0) target = $region25
    $region24: #{hexa_to_parallelogram.1} parent=1 // pred_region
      _
    $region25: #{hexa_to_parallelogram.1} parent=1 // pred_fallthru
      _
    // Predicated region
    $region26: #{hexa_to_parallelogram.1} parent=1 // pred_check
      _
    $region27: #{hexa_to_parallelogram.1} parent=1 // pred_check_branch
      %605 = sbr.rel (0) target = $region29
    $region28: #{hexa_to_parallelogram.1} parent=1 // pred_region
      _
    $region29: #{hexa_to_parallelogram.1} parent=1 // pred_fallthru
      _
    %606 = vsyncpa [#allocation3], 1
    %607 = vsyncpa [#allocation5], 1

</llo_original>
